<compile_context>
chip_gen: v6e
topology: v6e:2x2x1
jax: 0.10.0
libtpu: 0.0.40
codegen_flags: <defaults>
</compile_context>

<pallas_src>
import jax
import jax.numpy as jnp
from jax import lax
from jax.experimental import pallas as pl
from jax.experimental.pallas import tpu as pltpu


def _skipgram_kernel(main_idx_ref, ctx_idx_ref,     # (1, TB) int32 index tiles
                     main_tab_ref, ctx_tab_ref,     # (W, V) VMEM-resident tables
                     out_ref):                      # (1, TB) lane-dense output
    main_tab = main_tab_ref[...]                    # (W, V)
    ctx_tab = ctx_tab_ref[...]                      # (W, V)
    midx = main_idx_ref[0, :]                       # (TB,) int32, lane-laid
    cidx = ctx_idx_ref[0, :]                        # (TB,)

    W = main_tab.shape[0]
    TB = midx.shape[0]

    # One-hot selectors (W, TB): word axis on sublanes, batch tile on lanes.
    # Recomputed per grid step (see header comment re: megacore scratch init).
    iota_w = lax.broadcasted_iota(jnp.int32, (W, TB), 0)
    oh_m = (iota_w == midx[None, :]).astype(main_tab.dtype)   # (W, TB)
    oh_c = (iota_w == cidx[None, :]).astype(ctx_tab.dtype)    # (W, TB)

    # MXU gather, oriented (V, TB): contract the word axis of table and onehot.
    # Output N = TB (fills the 256-wide MXU); result is feature-on-sublane,
    # batch-on-lane, so no relayout is needed before the lane-dense store.
    dn = (((0,), (0,)), ((), ()))
    m_vt = lax.dot_general(main_tab, oh_m, dn,
                           preferred_element_type=jnp.float32)   # (V, TB)
    c_vt = lax.dot_general(ctx_tab, oh_c, dn,
                           preferred_element_type=jnp.float32)   # (V, TB)

    # Dot product = sublane reduction; already lane-major for the (1, TB) store.
    s = jnp.sum(m_vt * c_vt, axis=0)                # (TB,)
    out_ref[...] = jax.nn.sigmoid(s)[None, :].astype(out_ref.dtype)


def _canon_words(words):
    # Mirrors _unsqueeze_word_idx: accept (B,) or (B, 1) index tensors.
    if words.ndim == 1:
        return words.astype(jnp.int32)
    elif words.ndim == 2:
        return words[:, 0].astype(jnp.int32)
    else:
        raise Exception()


def _round_up(x, m):
    return ((x + m - 1) // m) * m


def skipgram_forward(word_pairs, main_emb, ctx_emb, *, tile_b=1024):
    main_words, ctx_words = word_pairs
    main_idx = _canon_words(main_words)
    ctx_idx = _canon_words(ctx_words)

    B = main_idx.shape[0]
    W, V = main_emb.shape

    # Lane-dense tile, multiple of 128, clamped so a small batch is one tile.
    # (For very large batches on v7x, prefer a tile_b giving an even num_tiles
    # so both TensorCores get equal work.)
    tile_b = max(128, min(_round_up(tile_b, 128), _round_up(B, 128)))
    num_tiles = pl.cdiv(B, tile_b)
    b_pad = num_tiles * tile_b
    pad = b_pad - B
    main_idx_p = jnp.pad(main_idx, (0, pad)).reshape(1, b_pad)
    ctx_idx_p = jnp.pad(ctx_idx, (0, pad)).reshape(1, b_pad)

    # Tables: constant index_map => DMA'd once, reused by every grid step.
    # When a table is big enough for buffering to matter, single-buffer it
    # (a revisited block never needs double buffering).
    table_bytes = int(W) * int(V) * main_emb.dtype.itemsize
    single_buffer_tables = table_bytes > (4 << 20)
    if single_buffer_tables:
        def _table_spec():
            return pl.BlockSpec((W, V), lambda t: (0, 0),
                                pipeline_mode=pl.Buffered(1))
    else:
        def _table_spec():
            return pl.BlockSpec((W, V), lambda t: (0, 0))

    # Explicit scoped-VMEM budget: the 16 MiB (v5e) / 32 MiB (v6e, v7x)
    # defaults bind long before physical VMEM for non-toy tables.
    bufs = 1 if single_buffer_tables else 2
    work_bytes = (
        2 * bufs * table_bytes            # main + ctx tables resident in VMEM
        + 2 * (W * tile_b * 4)            # one-hot temporaries
        + 2 * (V * tile_b * 4)            # gathered (V, TB) activations
        + 6 * (tile_b * 4)                # index tiles + output (double-buffered)
    )
    vmem_limit = max(32 << 20, min(128 << 20, work_bytes + (4 << 20)))

    grid_spec = pltpu.PrefetchScalarGridSpec(
        num_scalar_prefetch=0,
        grid=(num_tiles,),
        in_specs=[
            # Per-tile index rows (lane-dense int32 vectors).
            pl.BlockSpec((1, tile_b), lambda t: (0, t)),
            pl.BlockSpec((1, tile_b), lambda t: (0, t)),
            # Whole embedding tables, VMEM-resident.
            _table_spec(),
            _table_spec(),
        ],
        # Lane-blocked output: unmasked, contiguous stores; block sublane dim
        # (1) equals the full array dim, so the (8,128) rule holds for any B.
        out_specs=pl.BlockSpec((1, tile_b), lambda t: (0, t)),
    )

    out = pl.pallas_call(
        _skipgram_kernel,
        out_shape=jax.ShapeDtypeStruct((1, b_pad), jnp.float32),
        grid_spec=grid_spec,
        compiler_params=pltpu.CompilerParams(
            dimension_semantics=("parallel",),
            vmem_limit_bytes=int(vmem_limit)),
    )(main_idx_p, ctx_idx_p, main_emb, ctx_emb)

    return out.reshape(-1)[:B]  # (B,)


if __name__ == "__main__":
    word_number = 64
    vector_size = 128
    batch = 200          # deliberately not a multiple of 128

    key = jax.random.PRNGKey(0)
    k_main, k_ctx, k_mw, k_cw = jax.random.split(key, 4)

    # nn.Embedding default init ~ N(0, 1), deterministic here.
    main_emb = jax.random.normal(k_main, (word_number, vector_size), jnp.float32)
    ctx_emb = jax.random.normal(k_ctx, (word_number, vector_size), jnp.float32)

    main_words = jax.random.randint(k_mw, (batch,), 0, word_number, jnp.int32)
    ctx_words = jax.random.randint(k_cw, (batch,), 0, word_number, jnp.int32)

    out = skipgram_forward((main_words, ctx_words), main_emb, ctx_emb)
    out = jax.block_until_ready(out)

    # Pure-JAX reference for sanity.
    ref = jax.nn.sigmoid(
        jnp.sum(main_emb[main_words] * ctx_emb[ctx_words], axis=-1))
    assert out.shape == (batch,)
    assert jnp.allclose(out, ref, atol=1e-5, rtol=1e-5)

    print("KERNEL_OK")
</pallas_src>

<mosaic_0001>
module attributes {stable_mosaic.version = 11 : i64} {
  func.func @_skipgram_kernel(%arg0: i32, %arg1: memref<1x256xi32, #tpu.memory_space<vmem>>, %arg2: memref<1x256xi32, #tpu.memory_space<vmem>>, %arg3: memref<64x128xf32, #tpu.memory_space<vmem>>, %arg4: memref<64x128xf32, #tpu.memory_space<vmem>>, %arg5: memref<1x256xf32, #tpu.memory_space<vmem>>) attributes {dimension_semantics = [#tpu.dimension_semantics<parallel>], iteration_bounds = array<i64: 1>, scalar_prefetch = 0 : i64, scratch_operands = 0 : i64, tpu.core_type = #tpu.core_type<tc>, window_params = [{transform_indices = @transform_0, window_bounds = array<i64: 1, 256>}, {transform_indices = @transform_1, window_bounds = array<i64: 1, 256>}, {pipeline_mode = #tpu.pipeline_mode<synchronous>, transform_indices = @transform_2, window_bounds = array<i64: 64, 128>}, {pipeline_mode = #tpu.pipeline_mode<synchronous>, transform_indices = @transform_3, window_bounds = array<i64: 64, 128>}, {transform_indices = @transform_4, window_bounds = array<i64: 1, 256>}]} {
    %c0 = arith.constant 0 : index
    %c0_0 = arith.constant 0 : index
    %0 = vector.load %arg3[%c0, %c0_0] : memref<64x128xf32, #tpu.memory_space<vmem>>, vector<64x128xf32>
    %c0_1 = arith.constant 0 : index
    %c0_2 = arith.constant 0 : index
    %1 = vector.load %arg4[%c0_1, %c0_2] : memref<64x128xf32, #tpu.memory_space<vmem>>, vector<64x128xf32>
    %c0_3 = arith.constant 0 : index
    %c0_4 = arith.constant 0 : index
    %2 = vector.load %arg1[%c0_3, %c0_4] : memref<1x256xi32, #tpu.memory_space<vmem>>, vector<1x256xi32>
    %3 = vector.shape_cast %2 : vector<1x256xi32> to vector<256xi32>
    %c0_5 = arith.constant 0 : index
    %c0_6 = arith.constant 0 : index
    %4 = vector.load %arg2[%c0_5, %c0_6] : memref<1x256xi32, #tpu.memory_space<vmem>>, vector<1x256xi32>
    %5 = vector.shape_cast %4 : vector<1x256xi32> to vector<256xi32>
    %6 = tpu.iota {dimensions = array<i32: 0>} : vector<64x256xi32>
    %7 = vector.shape_cast %3 : vector<256xi32> to vector<1x256xi32>
    %8 = vector.broadcast %7 : vector<1x256xi32> to vector<64x256xi32>
    %9 = arith.cmpi eq, %6, %8 : vector<64x256xi32>
    %10 = arith.extui %9 : vector<64x256xi1> to vector<64x256xi32>
    %11 = arith.sitofp %10 : vector<64x256xi32> to vector<64x256xf32>
    %12 = vector.shape_cast %5 : vector<256xi32> to vector<1x256xi32>
    %13 = vector.broadcast %12 : vector<1x256xi32> to vector<64x256xi32>
    %14 = arith.cmpi eq, %6, %13 : vector<64x256xi32>
    %15 = arith.extui %14 : vector<64x256xi1> to vector<64x256xi32>
    %16 = arith.sitofp %15 : vector<64x256xi32> to vector<64x256xf32>
    %cst = arith.constant dense<0.000000e+00> : vector<128x256xf32>
    %17 = tpu.matmul %0, %11, %cst {dimension_numbers = #tpu.dot_dimension_numbers<[0], [0], [1], [1], [0, 1, 1, 1], [], []>} : vector<64x128xf32>, vector<64x256xf32>, vector<128x256xf32> -> vector<128x256xf32>
    %cst_7 = arith.constant dense<0.000000e+00> : vector<128x256xf32>
    %18 = tpu.matmul %1, %16, %cst_7 {dimension_numbers = #tpu.dot_dimension_numbers<[0], [0], [1], [1], [0, 1, 1, 1], [], []>} : vector<64x128xf32>, vector<64x256xf32>, vector<128x256xf32> -> vector<128x256xf32>
    %19 = arith.mulf %17, %18 : vector<128x256xf32>
    %cst_8 = arith.constant dense<0.000000e+00> : vector<256xf32>
    %20 = vector.multi_reduction <add>, %19, %cst_8 [0] : vector<128x256xf32> to vector<256xf32>
    %21 = arith.negf %20 : vector<256xf32>
    %22 = math.exp %21 : vector<256xf32>
    %cst_9 = arith.constant 1.000000e+00 : f32
    %23 = vector.broadcast %cst_9 : f32 to vector<256xf32>
    %24 = arith.addf %23, %22 : vector<256xf32>
    %25 = arith.divf %23, %24 : vector<256xf32>
    %26 = vector.shape_cast %25 : vector<256xf32> to vector<1x256xf32>
    %c0_10 = arith.constant 0 : index
    %c0_11 = arith.constant 0 : index
    %27 = vector.load %arg5[%c0_10, %c0_11] : memref<1x256xf32, #tpu.memory_space<vmem>>, vector<1x256xf32>
    tpu.vector_store %arg5[%c0_10, %c0_11], %26 {strides = array<i32>} : memref<1x256xf32, #tpu.memory_space<vmem>>, vector<1x256xf32>,
    return
  }
  func.func @transform_0(%arg0: i32) -> (i32, i32) {
    %c0_i32 = arith.constant 0 : i32
    %c0_i32_0 = arith.constant 0 : i32
    return %c0_i32, %arg0 : i32, i32
  }
  func.func @transform_1(%arg0: i32) -> (i32, i32) {
    %c0_i32 = arith.constant 0 : i32
    %c0_i32_0 = arith.constant 0 : i32
    return %c0_i32, %arg0 : i32, i32
  }
  func.func @transform_2(%arg0: i32) -> (i32, i32) {
    %c0_i32 = arith.constant 0 : i32
    %c0_i32_0 = arith.constant 0 : i32
    %c0_i32_1 = arith.constant 0 : i32
    return %c0_i32, %c0_i32_0 : i32, i32
  }
  func.func @transform_3(%arg0: i32) -> (i32, i32) {
    %c0_i32 = arith.constant 0 : i32
    %c0_i32_0 = arith.constant 0 : i32
    %c0_i32_1 = arith.constant 0 : i32
    return %c0_i32, %c0_i32_0 : i32, i32
  }
  func.func @transform_4(%arg0: i32) -> (i32, i32) {
    %c0_i32 = arith.constant 0 : i32
    %c0_i32_0 = arith.constant 0 : i32
    return %c0_i32, %arg0 : i32, i32
  }
}

</mosaic_0001>

<llo_original>
// kernel: tpu_custom_call.1
$region0: #{tpu_custom_call.1}
  #allocation0 [shape = 'u32[]', space=smem, size = 0x4, offset = 0x4, fixed_abs, tag = 'smem constant byte address 0x4 - core index']
  #allocation1 [shape = 'u32[144,128]{1,0:T(1,128)}', space=vmem, size = 0x12000, scoped, tag = 'internal scratch']
  %s0 = inlined_call_operand.hbm [shape: s32[1,256], index: 0, kind: input, shape index: {}]
  %s1 = inlined_call_operand.hbm [shape: s32[1,256], index: 1, kind: input, shape index: {}]
  %s2 = inlined_call_operand.hbm [shape: f32[64,128], index: 2, kind: input, shape index: {}]
  %s3 = inlined_call_operand.hbm [shape: f32[64,128], index: 3, kind: input, shape index: {}]
  %s4 = inlined_call_operand.hbm [shape: f32[1,256], index: 4, kind: output, shape index: {}]
  %s5 = sld [smem:[#allocation0]]
  $region42: #{tpu_custom_call.1} parent=0
    _
  %s7 = ssub.s32 1, %s5
  %s8 = scalar_select 0, %s7, %s5
  $region1: #{tpu_custom_call.1} parent=0
    #allocation2 [shape = 'u8[1024]{0}', space=vmem, size = 0x400, scoped, tag = 'input window, operand 0, single buffered']
    #allocation3 [shape = 's32[1]{0}', space=sflag, size = 0x4, scoped, tag = 'scoped memory for tpu_custom_call.1']
    #allocation4 [shape = 's32[1]{0}', space=sflag, size = 0x4, scoped, tag = 'scoped memory for tpu_custom_call.1']
    #allocation5 [shape = 'u8[1024]{0}', space=vmem, size = 0x400, scoped, tag = 'input window, operand 1, single buffered']
    #allocation6 [shape = 's32[1]{0}', space=sflag, size = 0x4, scoped, tag = 'scoped memory for tpu_custom_call.1']
    #allocation7 [shape = 'u8[32768]{0}', space=vmem, size = 0x8000, scoped, tag = 'input window, operand 2, single buffered']
    #allocation8 [shape = 'u8[32768]{0}', space=vmem, size = 0x8000, scoped, tag = 'input window, operand 3, single buffered']
    #allocation9 [shape = 's32[1]{0}', space=sflag, size = 0x4, scoped, tag = 'scoped memory for tpu_custom_call.1']
    #allocation10 [shape = 'u8[1024]{0}', space=vmem, size = 0x400, scoped, tag = 'output window, operand 0, single buffered']
    %9 = vsyncpa [#allocation3], 0
    %10 = vsyncpa [#allocation6], 0
    %11 = vsyncpa [#allocation9], 0
    %12 = vsyncpa [#allocation4], 0
    // Predicated region
    $region2: #{tpu_custom_call.1} parent=1 // pred_check
      _
    $region3: #{tpu_custom_call.1} parent=1 // pred_check_branch
      %14 = sbr.rel (0) target = $region5
    $region4: #{tpu_custom_call.1} parent=1 // pred_region
      %s16 = ssub.s32 32, 32
      %17 = vsyncadd [#allocation3], %s16
      %s19 = sshll.u32 [#allocation2], 4
      %s20 = int_to_ptr.vmem [resolvable:$true] %s19
      %22 = dma.hbm_to_vmem [thread:$0]  %s0, 32, %s20, [#allocation3]
    $region5: #{tpu_custom_call.1} parent=1 // pred_fallthru
      _
    // Predicated region
    $region6: #{tpu_custom_call.1} parent=1 // pred_check
      _
    $region7: #{tpu_custom_call.1} parent=1 // pred_check_branch
      %24 = sbr.rel (0) target = $region9
    $region8: #{tpu_custom_call.1} parent=1 // pred_region
      %s26 = ssub.s32 32, 32
      %27 = vsyncadd [#allocation6], %s26
      %s29 = sshll.u32 [#allocation5], 4
      %s30 = int_to_ptr.vmem [resolvable:$true] %s29
      %32 = dma.hbm_to_vmem [thread:$0]  %s1, 32, %s30, [#allocation6]
    $region9: #{tpu_custom_call.1} parent=1 // pred_fallthru
      _
    // Predicated region
    $region10: #{tpu_custom_call.1} parent=1 // pred_check
      _
    $region11: #{tpu_custom_call.1} parent=1 // pred_check_branch
      %34 = sbr.rel (0) target = $region13
    $region12: #{tpu_custom_call.1} parent=1 // pred_region
      %s36 = ssub.s32 1024, 1024
      %37 = vsyncadd [#allocation6], %s36
      %s38 = sshll.u32 [#allocation7], 4
      %s39 = int_to_ptr.vmem [resolvable:$true] %s38
      %44 = dma.hbm_to_vmem [thread:$0]  %s2, 1024, %s39, [#allocation6], 128, 128, 8
    $region13: #{tpu_custom_call.1} parent=1 // pred_fallthru
      _
    // Predicated region
    $region14: #{tpu_custom_call.1} parent=1 // pred_check
      _
    $region15: #{tpu_custom_call.1} parent=1 // pred_check_branch
      %46 = sbr.rel (0) target = $region17
    $region16: #{tpu_custom_call.1} parent=1 // pred_region
      %s48 = ssub.s32 1024, 1024
      %49 = vsyncadd [#allocation9], %s48
      %s50 = sshll.u32 [#allocation8], 4
      %s51 = int_to_ptr.vmem [resolvable:$true] %s50
      %56 = dma.hbm_to_vmem [thread:$0]  %s3, 1024, %s51, [#allocation9], 128, 128, 8
    $region17: #{tpu_custom_call.1} parent=1 // pred_fallthru
      _
    // Predicated region
    $region18: #{tpu_custom_call.1} parent=1 // pred_check
      _
    $region19: #{tpu_custom_call.1} parent=1 // pred_check_branch
      %58 = sbr.rel (0) target = $region21
    $region20: #{tpu_custom_call.1} parent=1 // pred_region
      %59 = dma.done [#allocation3], 32
    $region21: #{tpu_custom_call.1} parent=1 // pred_fallthru
      _
    // Predicated region
    $region22: #{tpu_custom_call.1} parent=1 // pred_check
      _
    $region23: #{tpu_custom_call.1} parent=1 // pred_check_branch
      %61 = sbr.rel (0) target = $region25
    $region24: #{tpu_custom_call.1} parent=1 // pred_region
      %62 = dma.done [#allocation6], 32
    $region25: #{tpu_custom_call.1} parent=1 // pred_fallthru
      _
    // Predicated region
    $region26: #{tpu_custom_call.1} parent=1 // pred_check
      _
    $region27: #{tpu_custom_call.1} parent=1 // pred_check_branch
      %64 = sbr.rel (0) target = $region29
    $region28: #{tpu_custom_call.1} parent=1 // pred_region
      %65 = dma.done [#allocation6], 1024
    $region29: #{tpu_custom_call.1} parent=1 // pred_fallthru
      _
    // Predicated region
    $region30: #{tpu_custom_call.1} parent=1 // pred_check
      _
    $region31: #{tpu_custom_call.1} parent=1 // pred_check_branch
      %67 = sbr.rel (0) target = $region33
    $region32: #{tpu_custom_call.1} parent=1 // pred_region
      %68 = dma.done [#allocation9], 1024
    $region33: #{tpu_custom_call.1} parent=1 // pred_fallthru
      _
    %v69 = vld [vmem:[#allocation7] sm:$0xff]
    %v70 = vld [vmem:[#allocation7 + $0x8] sm:$0xff]
    %v71 = vld [vmem:[#allocation7 + $0x10] sm:$0xff]
    %v72 = vld [vmem:[#allocation7 + $0x18] sm:$0xff]
    %v73 = vld [vmem:[#allocation7 + $0x20] sm:$0xff]
    %v74 = vld [vmem:[#allocation7 + $0x28] sm:$0xff]
    %v75 = vld [vmem:[#allocation7 + $0x30] sm:$0xff]
    %v76 = vld [vmem:[#allocation7 + $0x38] sm:$0xff]
    %v77 = vld [vmem:[#allocation8] sm:$0xff]
    %v78 = vld [vmem:[#allocation8 + $0x8] sm:$0xff]
    %v79 = vld [vmem:[#allocation8 + $0x10] sm:$0xff]
    %v80 = vld [vmem:[#allocation8 + $0x18] sm:$0xff]
    %v81 = vld [vmem:[#allocation8 + $0x20] sm:$0xff]
    %v82 = vld [vmem:[#allocation8 + $0x28] sm:$0xff]
    %v83 = vld [vmem:[#allocation8 + $0x30] sm:$0xff]
    %v84 = vld [vmem:[#allocation8 + $0x38] sm:$0xff]
    %v85 = vld [vmem:[#allocation2] sm:$0x3]
    %v86 = vld [vmem:[#allocation5] sm:$0x3]
    %v87 = vlaneseq
    %v88 = vshrl.u32 %v87, 7
    %v89 = vadd.s32 %v88, 8
    %v90 = vadd.s32 %v88, 16
    %v91 = vadd.s32 %v88, 24
    %v92 = vadd.s32 %v88, 32
    %v93 = vadd.s32 %v88, 40
    %v94 = vadd.s32 %v88, 48
    %v95 = vadd.s32 %v88, 56
    %v96 = vlaneseq
    %v97 = vshrl.u32 %v96, 7
    %v98 = vsub.s32 0, %v97
    %v99 = vrot.slane %v85, %v98
    %v100 = vlaneseq
    %v101 = vshrl.u32 %v100, 7
    %v102 = vsub.s32 1, %v101
    %v103 = vrot.slane %v85, %v102
    %vm104 = vcmp.eq.s32.totalorder %v88, %v99
    %vm105 = vcmp.eq.s32.totalorder %v88, %v103
    %vm106 = vcmp.eq.s32.totalorder %v89, %v99
    %vm107 = vcmp.eq.s32.totalorder %v89, %v103
    %vm108 = vcmp.eq.s32.totalorder %v90, %v99
    %vm109 = vcmp.eq.s32.totalorder %v90, %v103
    %vm110 = vcmp.eq.s32.totalorder %v91, %v99
    %vm111 = vcmp.eq.s32.totalorder %v91, %v103
    %vm112 = vcmp.eq.s32.totalorder %v92, %v99
    %vm113 = vcmp.eq.s32.totalorder %v92, %v103
    %vm114 = vcmp.eq.s32.totalorder %v93, %v99
    %vm115 = vcmp.eq.s32.totalorder %v93, %v103
    %vm116 = vcmp.eq.s32.totalorder %v94, %v99
    %vm117 = vcmp.eq.s32.totalorder %v94, %v103
    %vm118 = vcmp.eq.s32.totalorder %v95, %v99
    %vm119 = vcmp.eq.s32.totalorder %v95, %v103
    %v120 = vsel %vm104, 1, 0
    %v121 = vsel %vm105, 1, 0
    %v122 = vsel %vm106, 1, 0
    %v123 = vsel %vm107, 1, 0
    %v124 = vsel %vm108, 1, 0
    %v125 = vsel %vm109, 1, 0
    %v126 = vsel %vm110, 1, 0
    %v127 = vsel %vm111, 1, 0
    %v128 = vsel %vm112, 1, 0
    %v129 = vsel %vm113, 1, 0
    %v130 = vsel %vm114, 1, 0
    %v131 = vsel %vm115, 1, 0
    %v132 = vsel %vm116, 1, 0
    %v133 = vsel %vm117, 1, 0
    %v134 = vsel %vm118, 1, 0
    %v135 = vsel %vm119, 1, 0
    %v136 = vcvt.s32.f32 %v120
    %v137 = vcvt.s32.f32 %v121
    %v138 = vcvt.s32.f32 %v122
    %v139 = vcvt.s32.f32 %v123
    %v140 = vcvt.s32.f32 %v124
    %v141 = vcvt.s32.f32 %v125
    %v142 = vcvt.s32.f32 %v126
    %v143 = vcvt.s32.f32 %v127
    %v144 = vcvt.s32.f32 %v128
    %v145 = vcvt.s32.f32 %v129
    %v146 = vcvt.s32.f32 %v130
    %v147 = vcvt.s32.f32 %v131
    %v148 = vcvt.s32.f32 %v132
    %v149 = vcvt.s32.f32 %v133
    %v150 = vcvt.s32.f32 %v134
    %v151 = vcvt.s32.f32 %v135
    %v152 = vlaneseq
    %v153 = vshrl.u32 %v152, 7
    %v154 = vsub.s32 0, %v153
    %v155 = vrot.slane %v86, %v154
    %v156 = vlaneseq
    %v157 = vshrl.u32 %v156, 7
    %v158 = vsub.s32 1, %v157
    %v159 = vrot.slane %v86, %v158
    %vm160 = vcmp.eq.s32.totalorder %v88, %v155
    %vm161 = vcmp.eq.s32.totalorder %v88, %v159
    %vm162 = vcmp.eq.s32.totalorder %v89, %v155
    %vm163 = vcmp.eq.s32.totalorder %v89, %v159
    %vm164 = vcmp.eq.s32.totalorder %v90, %v155
    %vm165 = vcmp.eq.s32.totalorder %v90, %v159
    %vm166 = vcmp.eq.s32.totalorder %v91, %v155
    %vm167 = vcmp.eq.s32.totalorder %v91, %v159
    %vm168 = vcmp.eq.s32.totalorder %v92, %v155
    %vm169 = vcmp.eq.s32.totalorder %v92, %v159
    %vm170 = vcmp.eq.s32.totalorder %v93, %v155
    %vm171 = vcmp.eq.s32.totalorder %v93, %v159
    %vm172 = vcmp.eq.s32.totalorder %v94, %v155
    %vm173 = vcmp.eq.s32.totalorder %v94, %v159
    %vm174 = vcmp.eq.s32.totalorder %v95, %v155
    %vm175 = vcmp.eq.s32.totalorder %v95, %v159
    %v176 = vsel %vm160, 1, 0
    %v177 = vsel %vm161, 1, 0
    %v178 = vsel %vm162, 1, 0
    %v179 = vsel %vm163, 1, 0
    %v180 = vsel %vm164, 1, 0
    %v181 = vsel %vm165, 1, 0
    %v182 = vsel %vm166, 1, 0
    %v183 = vsel %vm167, 1, 0
    %v184 = vsel %vm168, 1, 0
    %v185 = vsel %vm169, 1, 0
    %v186 = vsel %vm170, 1, 0
    %v187 = vsel %vm171, 1, 0
    %v188 = vsel %vm172, 1, 0
    %v189 = vsel %vm173, 1, 0
    %v190 = vsel %vm174, 1, 0
    %v191 = vsel %vm175, 1, 0
    %v192 = vcvt.s32.f32 %v176
    %v193 = vcvt.s32.f32 %v177
    %v194 = vcvt.s32.f32 %v178
    %v195 = vcvt.s32.f32 %v179
    %v196 = vcvt.s32.f32 %v180
    %v197 = vcvt.s32.f32 %v181
    %v198 = vcvt.s32.f32 %v182
    %v199 = vcvt.s32.f32 %v183
    %v200 = vcvt.s32.f32 %v184
    %v201 = vcvt.s32.f32 %v185
    %v202 = vcvt.s32.f32 %v186
    %v203 = vcvt.s32.f32 %v187
    %v204 = vcvt.s32.f32 %v188
    %v205 = vcvt.s32.f32 %v189
    %v206 = vcvt.s32.f32 %v190
    %v207 = vcvt.s32.f32 %v191
    %208 = vxpose.xlu0.b32.start [1/16] %v69, 128
    %209 = vxpose.xlu0.b32.cont [2/16] %v70, 128
    %210 = vxpose.xlu0.b32.cont [3/16] %v71, 128
    %211 = vxpose.xlu0.b32.cont [4/16] %v72, 128
    %212 = vxpose.xlu0.b32.cont [5/16] %v73, 128
    %213 = vxpose.xlu0.b32.cont [6/16] %v74, 128
    %214 = vxpose.xlu0.b32.cont [7/16] %v75, 128
    %215 = vxpose.xlu0.b32.cont [8/16] %v76, 128
    %216 = vxpose.xlu0.b32.cont [9/16] 0.0, 128
    %217 = vxpose.xlu0.b32.cont [10/16] 0.0, 128
    %218 = vxpose.xlu0.b32.cont [11/16] 0.0, 128
    %219 = vxpose.xlu0.b32.cont [12/16] 0.0, 128
    %220 = vxpose.xlu0.b32.cont [13/16] 0.0, 128
    %221 = vxpose.xlu0.b32.cont [14/16] 0.0, 128
    %222 = vxpose.xlu0.b32.cont [15/16] 0.0, 128
    %223 = vxpose.xlu0.b32.end [16/16] 0.0, 128
    %v224 = vpop.trf.xlu0
    %v225 = vpop.trf.xlu0
    %v226 = vpop.trf.xlu0
    %v227 = vpop.trf.xlu0
    %v228 = vpop.trf.xlu0
    %v229 = vpop.trf.xlu0
    %v230 = vpop.trf.xlu0
    %v231 = vpop.trf.xlu0
    %v232 = vpop.trf.xlu0
    %v233 = vpop.trf.xlu0
    %v234 = vpop.trf.xlu0
    %v235 = vpop.trf.xlu0
    %v236 = vpop.trf.xlu0
    %v237 = vpop.trf.xlu0
    %v238 = vpop.trf.xlu0
    %v239 = vpop.trf.xlu0
    %vm240 = vcmask 523264
    %v242 = vsel %vm240, %v224, 0
    %v245 = vsel %vm240, %v225, 0
    %v248 = vsel %vm240, %v226, 0
    %v251 = vsel %vm240, %v227, 0
    %v254 = vsel %vm240, %v228, 0
    %v257 = vsel %vm240, %v229, 0
    %v260 = vsel %vm240, %v230, 0
    %v263 = vsel %vm240, %v231, 0
    %v266 = vsel %vm240, %v232, 0
    %v269 = vsel %vm240, %v233, 0
    %v272 = vsel %vm240, %v234, 0
    %v275 = vsel %vm240, %v235, 0
    %v278 = vsel %vm240, %v236, 0
    %v281 = vsel %vm240, %v237, 0
    %v284 = vsel %vm240, %v238, 0
    %v287 = vsel %vm240, %v239, 0
    %289 = vmatprep.subr.mxu0 0.0
    %290 = vmatpush1.msra.mxu0 0.0
    %291 = vmatprep.subr.mxu0 0.0
    %292 = vmatpush1.msra.mxu0 0.0
    %293 = vmatprep.subr.mxu0 0.0
    %294 = vmatpush1.msra.mxu0 0.0
    %295 = vmatprep.subr.mxu0 0.0
    %296 = vmatpush1.msra.mxu0 0.0
    %297 = vmatprep.subr.mxu0 0.0
    %298 = vmatpush1.msra.mxu0 0.0
    %299 = vmatprep.subr.mxu0 0.0
    %300 = vmatpush1.msra.mxu0 0.0
    %301 = vmatprep.subr.mxu0 0.0
    %302 = vmatpush1.msra.mxu0 0.0
    %303 = vmatprep.subr.mxu0 0.0
    %304 = vmatpush1.msra.mxu0 0.0
    %305 = vmatprep.subr.mxu0 %v151
    %306 = vmatpush1.msra.mxu0 %v150
    %307 = vmatprep.subr.mxu0 %v149
    %308 = vmatpush1.msra.mxu0 %v148
    %309 = vmatprep.subr.mxu0 %v147
    %310 = vmatpush1.msra.mxu0 %v146
    %311 = vmatprep.subr.mxu0 %v145
    %312 = vmatpush1.msra.mxu0 %v144
    %313 = vmatprep.subr.mxu0 %v143
    %314 = vmatpush1.msra.mxu0 %v142
    %315 = vmatprep.subr.mxu0 %v141
    %316 = vmatpush1.msra.mxu0 %v140
    %317 = vmatprep.subr.mxu0 %v139
    %318 = vmatpush1.msra.mxu0 %v138
    %319 = vmatprep.subr.mxu0 %v137
    %320 = vmatpush1.msra.mxu0 %v136
    %321 = vmatprep.subr.mxu0 0.0
    %322 = vmatpush2.msra.mxu0 0.0
    %323 = vmatprep.subr.mxu0 0.0
    %324 = vmatpush2.msra.mxu0 0.0
    %325 = vmatprep.subr.mxu0 0.0
    %326 = vmatpush2.msra.mxu0 0.0
    %327 = vmatprep.subr.mxu0 0.0
    %328 = vmatpush2.msra.mxu0 0.0
    %329 = vmatprep.subr.mxu0 0.0
    %330 = vmatpush2.msra.mxu0 0.0
    %331 = vmatprep.subr.mxu0 0.0
    %332 = vmatpush2.msra.mxu0 0.0
    %333 = vmatprep.subr.mxu0 0.0
    %334 = vmatpush2.msra.mxu0 0.0
    %335 = vmatprep.subr.mxu0 0.0
    %336 = vmatpush2.msra.mxu0 0.0
    %337 = vmatprep.subr.mxu0 0.0
    %338 = vmatpush2.msra.mxu0 0.0
    %339 = vmatprep.subr.mxu0 0.0
    %340 = vmatpush2.msra.mxu0 0.0
    %341 = vmatprep.subr.mxu0 0.0
    %342 = vmatpush2.msra.mxu0 0.0
    %343 = vmatprep.subr.mxu0 0.0
    %344 = vmatpush2.msra.mxu0 0.0
    %345 = vmatprep.subr.mxu0 0.0
    %346 = vmatpush2.msra.mxu0 0.0
    %347 = vmatprep.subr.mxu0 0.0
    %348 = vmatpush2.msra.mxu0 0.0
    %349 = vmatprep.subr.mxu0 0.0
    %350 = vmatpush2.msra.mxu0 0.0
    %351 = vmatprep.subr.mxu0 0.0
    %352 = vmatpush2.msra.mxu0 0.0
    %353 = vmatprep.mubr.f32.mxu0 0.0
    %354 = vmatmul.mubr.f32.gmra.mxu0 %v242
    %v355 = vpop.f32.mrf.mxu0
    %v356 = vadd.f32 0.0, %v355
    %v357 = vpop.f32.mrf.mxu0
    %v358 = vadd.f32 0.0, %v357
    %359 = vmatprep.mubr.f32.mxu0 0.0
    %360 = vmatmul.mubr.f32.gmra.mxu0 %v245
    %v361 = vpop.f32.mrf.mxu0
    %v362 = vadd.f32 0.0, %v361
    %v363 = vpop.f32.mrf.mxu0
    %v364 = vadd.f32 0.0, %v363
    %365 = vmatprep.mubr.f32.mxu0 0.0
    %366 = vmatmul.mubr.f32.gmra.mxu0 %v248
    %v367 = vpop.f32.mrf.mxu0
    %v368 = vadd.f32 0.0, %v367
    %v369 = vpop.f32.mrf.mxu0
    %v370 = vadd.f32 0.0, %v369
    %371 = vmatprep.mubr.f32.mxu0 0.0
    %372 = vmatmul.mubr.f32.gmra.mxu0 %v251
    %v373 = vpop.f32.mrf.mxu0
    %v374 = vadd.f32 0.0, %v373
    %v375 = vpop.f32.mrf.mxu0
    %v376 = vadd.f32 0.0, %v375
    %377 = vmatprep.mubr.f32.mxu0 0.0
    %378 = vmatmul.mubr.f32.gmra.mxu0 %v254
    %v379 = vpop.f32.mrf.mxu0
    %v380 = vadd.f32 0.0, %v379
    %v381 = vpop.f32.mrf.mxu0
    %v382 = vadd.f32 0.0, %v381
    %383 = vmatprep.mubr.f32.mxu0 0.0
    %384 = vmatmul.mubr.f32.gmra.mxu0 %v257
    %v385 = vpop.f32.mrf.mxu0
    %v386 = vadd.f32 0.0, %v385
    %v387 = vpop.f32.mrf.mxu0
    %v388 = vadd.f32 0.0, %v387
    %389 = vmatprep.mubr.f32.mxu0 0.0
    %390 = vmatmul.mubr.f32.gmra.mxu0 %v260
    %v391 = vpop.f32.mrf.mxu0
    %v392 = vadd.f32 0.0, %v391
    %v393 = vpop.f32.mrf.mxu0
    %v394 = vadd.f32 0.0, %v393
    %395 = vmatprep.mubr.f32.mxu0 0.0
    %396 = vmatmul.mubr.f32.gmra.mxu0 %v263
    %v397 = vpop.f32.mrf.mxu0
    %v398 = vadd.f32 0.0, %v397
    %v399 = vpop.f32.mrf.mxu0
    %v400 = vadd.f32 0.0, %v399
    %401 = vmatprep.mubr.f32.mxu0 0.0
    %402 = vmatmul.mubr.f32.gmra.mxu0 %v266
    %v403 = vpop.f32.mrf.mxu0
    %v404 = vadd.f32 0.0, %v403
    %v405 = vpop.f32.mrf.mxu0
    %v406 = vadd.f32 0.0, %v405
    %407 = vmatprep.mubr.f32.mxu0 0.0
    %408 = vmatmul.mubr.f32.gmra.mxu0 %v269
    %v409 = vpop.f32.mrf.mxu0
    %v410 = vadd.f32 0.0, %v409
    %v411 = vpop.f32.mrf.mxu0
    %v412 = vadd.f32 0.0, %v411
    %413 = vmatprep.mubr.f32.mxu0 0.0
    %414 = vmatmul.mubr.f32.gmra.mxu0 %v272
    %v415 = vpop.f32.mrf.mxu0
    %v416 = vadd.f32 0.0, %v415
    %v417 = vpop.f32.mrf.mxu0
    %v418 = vadd.f32 0.0, %v417
    %419 = vmatprep.mubr.f32.mxu0 0.0
    %420 = vmatmul.mubr.f32.gmra.mxu0 %v275
    %v421 = vpop.f32.mrf.mxu0
    %v422 = vadd.f32 0.0, %v421
    %v423 = vpop.f32.mrf.mxu0
    %v424 = vadd.f32 0.0, %v423
    %425 = vmatprep.mubr.f32.mxu0 0.0
    %426 = vmatmul.mubr.f32.gmra.mxu0 %v278
    %v427 = vpop.f32.mrf.mxu0
    %v428 = vadd.f32 0.0, %v427
    %v429 = vpop.f32.mrf.mxu0
    %v430 = vadd.f32 0.0, %v429
    %431 = vmatprep.mubr.f32.mxu0 0.0
    %432 = vmatmul.mubr.f32.gmra.mxu0 %v281
    %v433 = vpop.f32.mrf.mxu0
    %v434 = vadd.f32 0.0, %v433
    %v435 = vpop.f32.mrf.mxu0
    %v436 = vadd.f32 0.0, %v435
    %437 = vmatprep.mubr.f32.mxu0 0.0
    %438 = vmatmul.mubr.f32.gmra.mxu0 %v284
    %v439 = vpop.f32.mrf.mxu0
    %v440 = vadd.f32 0.0, %v439
    %v441 = vpop.f32.mrf.mxu0
    %v442 = vadd.f32 0.0, %v441
    %443 = vmatprep.mubr.f32.mxu0 0.0
    %444 = vmatmul.mubr.f32.gmra.mxu0 %v287
    %v445 = vpop.f32.mrf.mxu0
    %v446 = vadd.f32 0.0, %v445
    %v447 = vpop.f32.mrf.mxu0
    %v448 = vadd.f32 0.0, %v447
    %449 = vdwg.mxu0
    %450 = vxpose.xlu0.b32.start [1/16] %v77, 128
    %451 = vxpose.xlu0.b32.cont [2/16] %v78, 128
    %452 = vxpose.xlu0.b32.cont [3/16] %v79, 128
    %453 = vxpose.xlu0.b32.cont [4/16] %v80, 128
    %454 = vxpose.xlu0.b32.cont [5/16] %v81, 128
    %455 = vxpose.xlu0.b32.cont [6/16] %v82, 128
    %456 = vxpose.xlu0.b32.cont [7/16] %v83, 128
    %457 = vxpose.xlu0.b32.cont [8/16] %v84, 128
    %458 = vxpose.xlu0.b32.cont [9/16] 0.0, 128
    %459 = vxpose.xlu0.b32.cont [10/16] 0.0, 128
    %460 = vxpose.xlu0.b32.cont [11/16] 0.0, 128
    %461 = vxpose.xlu0.b32.cont [12/16] 0.0, 128
    %462 = vxpose.xlu0.b32.cont [13/16] 0.0, 128
    %463 = vxpose.xlu0.b32.cont [14/16] 0.0, 128
    %464 = vxpose.xlu0.b32.cont [15/16] 0.0, 128
    %465 = vxpose.xlu0.b32.end [16/16] 0.0, 128
    %v466 = vpop.trf.xlu0
    %v467 = vpop.trf.xlu0
    %v468 = vpop.trf.xlu0
    %v469 = vpop.trf.xlu0
    %v470 = vpop.trf.xlu0
    %v471 = vpop.trf.xlu0
    %v472 = vpop.trf.xlu0
    %v473 = vpop.trf.xlu0
    %v474 = vpop.trf.xlu0
    %v475 = vpop.trf.xlu0
    %v476 = vpop.trf.xlu0
    %v477 = vpop.trf.xlu0
    %v478 = vpop.trf.xlu0
    %v479 = vpop.trf.xlu0
    %v480 = vpop.trf.xlu0
    %v481 = vpop.trf.xlu0
    %v483 = vsel %vm240, %v466, 0
    %v486 = vsel %vm240, %v467, 0
    %v489 = vsel %vm240, %v468, 0
    %v492 = vsel %vm240, %v469, 0
    %v495 = vsel %vm240, %v470, 0
    %v498 = vsel %vm240, %v471, 0
    %v501 = vsel %vm240, %v472, 0
    %v504 = vsel %vm240, %v473, 0
    %v507 = vsel %vm240, %v474, 0
    %v510 = vsel %vm240, %v475, 0
    %v513 = vsel %vm240, %v476, 0
    %v516 = vsel %vm240, %v477, 0
    %v519 = vsel %vm240, %v478, 0
    %v522 = vsel %vm240, %v479, 0
    %v525 = vsel %vm240, %v480, 0
    %v528 = vsel %vm240, %v481, 0
    %530 = vmatprep.subr.mxu0 0.0
    %531 = vmatpush1.msra.mxu0 0.0
    %532 = vmatprep.subr.mxu0 0.0
    %533 = vmatpush1.msra.mxu0 0.0
    %534 = vmatprep.subr.mxu0 0.0
    %535 = vmatpush1.msra.mxu0 0.0
    %536 = vmatprep.subr.mxu0 0.0
    %537 = vmatpush1.msra.mxu0 0.0
    %538 = vmatprep.subr.mxu0 0.0
    %539 = vmatpush1.msra.mxu0 0.0
    %540 = vmatprep.subr.mxu0 0.0
    %541 = vmatpush1.msra.mxu0 0.0
    %542 = vmatprep.subr.mxu0 0.0
    %543 = vmatpush1.msra.mxu0 0.0
    %544 = vmatprep.subr.mxu0 0.0
    %545 = vmatpush1.msra.mxu0 0.0
    %546 = vmatprep.subr.mxu0 %v207
    %547 = vmatpush1.msra.mxu0 %v206
    %548 = vmatprep.subr.mxu0 %v205
    %549 = vmatpush1.msra.mxu0 %v204
    %550 = vmatprep.subr.mxu0 %v203
    %551 = vmatpush1.msra.mxu0 %v202
    %552 = vmatprep.subr.mxu0 %v201
    %553 = vmatpush1.msra.mxu0 %v200
    %554 = vmatprep.subr.mxu0 %v199
    %555 = vmatpush1.msra.mxu0 %v198
    %556 = vmatprep.subr.mxu0 %v197
    %557 = vmatpush1.msra.mxu0 %v196
    %558 = vmatprep.subr.mxu0 %v195
    %559 = vmatpush1.msra.mxu0 %v194
    %560 = vmatprep.subr.mxu0 %v193
    %561 = vmatpush1.msra.mxu0 %v192
    %562 = vmatprep.subr.mxu0 0.0
    %563 = vmatpush2.msra.mxu0 0.0
    %564 = vmatprep.subr.mxu0 0.0
    %565 = vmatpush2.msra.mxu0 0.0
    %566 = vmatprep.subr.mxu0 0.0
    %567 = vmatpush2.msra.mxu0 0.0
    %568 = vmatprep.subr.mxu0 0.0
    %569 = vmatpush2.msra.mxu0 0.0
    %570 = vmatprep.subr.mxu0 0.0
    %571 = vmatpush2.msra.mxu0 0.0
    %572 = vmatprep.subr.mxu0 0.0
    %573 = vmatpush2.msra.mxu0 0.0
    %574 = vmatprep.subr.mxu0 0.0
    %575 = vmatpush2.msra.mxu0 0.0
    %576 = vmatprep.subr.mxu0 0.0
    %577 = vmatpush2.msra.mxu0 0.0
    %578 = vmatprep.subr.mxu0 0.0
    %579 = vmatpush2.msra.mxu0 0.0
    %580 = vmatprep.subr.mxu0 0.0
    %581 = vmatpush2.msra.mxu0 0.0
    %582 = vmatprep.subr.mxu0 0.0
    %583 = vmatpush2.msra.mxu0 0.0
    %584 = vmatprep.subr.mxu0 0.0
    %585 = vmatpush2.msra.mxu0 0.0
    %586 = vmatprep.subr.mxu0 0.0
    %587 = vmatpush2.msra.mxu0 0.0
    %588 = vmatprep.subr.mxu0 0.0
    %589 = vmatpush2.msra.mxu0 0.0
    %590 = vmatprep.subr.mxu0 0.0
    %591 = vmatpush2.msra.mxu0 0.0
    %592 = vmatprep.subr.mxu0 0.0
    %593 = vmatpush2.msra.mxu0 0.0
    %594 = vmatprep.mubr.f32.mxu0 0.0
    %595 = vmatmul.mubr.f32.gmra.mxu0 %v483
    %v596 = vpop.f32.mrf.mxu0
    %v597 = vadd.f32 0.0, %v596
    %v598 = vpop.f32.mrf.mxu0
    %v599 = vadd.f32 0.0, %v598
    %600 = vmatprep.mubr.f32.mxu0 0.0
    %601 = vmatmul.mubr.f32.gmra.mxu0 %v486
    %v602 = vpop.f32.mrf.mxu0
    %v603 = vadd.f32 0.0, %v602
    %v604 = vpop.f32.mrf.mxu0
    %v605 = vadd.f32 0.0, %v604
    %606 = vmatprep.mubr.f32.mxu0 0.0
    %607 = vmatmul.mubr.f32.gmra.mxu0 %v489
    %v608 = vpop.f32.mrf.mxu0
    %v609 = vadd.f32 0.0, %v608
    %v610 = vpop.f32.mrf.mxu0
    %v611 = vadd.f32 0.0, %v610
    %612 = vmatprep.mubr.f32.mxu0 0.0
    %613 = vmatmul.mubr.f32.gmra.mxu0 %v492
    %v614 = vpop.f32.mrf.mxu0
    %v615 = vadd.f32 0.0, %v614
    %v616 = vpop.f32.mrf.mxu0
    %v617 = vadd.f32 0.0, %v616
    %618 = vmatprep.mubr.f32.mxu0 0.0
    %619 = vmatmul.mubr.f32.gmra.mxu0 %v495
    %v620 = vpop.f32.mrf.mxu0
    %v621 = vadd.f32 0.0, %v620
    %v622 = vpop.f32.mrf.mxu0
    %v623 = vadd.f32 0.0, %v622
    %624 = vmatprep.mubr.f32.mxu0 0.0
    %625 = vmatmul.mubr.f32.gmra.mxu0 %v498
    %v626 = vpop.f32.mrf.mxu0
    %v627 = vadd.f32 0.0, %v626
    %v628 = vpop.f32.mrf.mxu0
    %v629 = vadd.f32 0.0, %v628
    %630 = vmatprep.mubr.f32.mxu0 0.0
    %631 = vmatmul.mubr.f32.gmra.mxu0 %v501
    %v632 = vpop.f32.mrf.mxu0
    %v633 = vadd.f32 0.0, %v632
    %v634 = vpop.f32.mrf.mxu0
    %v635 = vadd.f32 0.0, %v634
    %636 = vmatprep.mubr.f32.mxu0 0.0
    %637 = vmatmul.mubr.f32.gmra.mxu0 %v504
    %v638 = vpop.f32.mrf.mxu0
    %v639 = vadd.f32 0.0, %v638
    %v640 = vpop.f32.mrf.mxu0
    %v641 = vadd.f32 0.0, %v640
    %642 = vmatprep.mubr.f32.mxu0 0.0
    %643 = vmatmul.mubr.f32.gmra.mxu0 %v507
    %v644 = vpop.f32.mrf.mxu0
    %v645 = vadd.f32 0.0, %v644
    %v646 = vpop.f32.mrf.mxu0
    %v647 = vadd.f32 0.0, %v646
    %648 = vmatprep.mubr.f32.mxu0 0.0
    %649 = vmatmul.mubr.f32.gmra.mxu0 %v510
    %v650 = vpop.f32.mrf.mxu0
    %v651 = vadd.f32 0.0, %v650
    %v652 = vpop.f32.mrf.mxu0
    %v653 = vadd.f32 0.0, %v652
    %654 = vmatprep.mubr.f32.mxu0 0.0
    %655 = vmatmul.mubr.f32.gmra.mxu0 %v513
    %v656 = vpop.f32.mrf.mxu0
    %v657 = vadd.f32 0.0, %v656
    %v658 = vpop.f32.mrf.mxu0
    %v659 = vadd.f32 0.0, %v658
    %660 = vmatprep.mubr.f32.mxu0 0.0
    %661 = vmatmul.mubr.f32.gmra.mxu0 %v516
    %v662 = vpop.f32.mrf.mxu0
    %v663 = vadd.f32 0.0, %v662
    %v664 = vpop.f32.mrf.mxu0
    %v665 = vadd.f32 0.0, %v664
    %666 = vmatprep.mubr.f32.mxu0 0.0
    %667 = vmatmul.mubr.f32.gmra.mxu0 %v519
    %v668 = vpop.f32.mrf.mxu0
    %v669 = vadd.f32 0.0, %v668
    %v670 = vpop.f32.mrf.mxu0
    %v671 = vadd.f32 0.0, %v670
    %672 = vmatprep.mubr.f32.mxu0 0.0
    %673 = vmatmul.mubr.f32.gmra.mxu0 %v522
    %v674 = vpop.f32.mrf.mxu0
    %v675 = vadd.f32 0.0, %v674
    %v676 = vpop.f32.mrf.mxu0
    %v677 = vadd.f32 0.0, %v676
    %678 = vmatprep.mubr.f32.mxu0 0.0
    %679 = vmatmul.mubr.f32.gmra.mxu0 %v525
    %v680 = vpop.f32.mrf.mxu0
    %v681 = vadd.f32 0.0, %v680
    %v682 = vpop.f32.mrf.mxu0
    %v683 = vadd.f32 0.0, %v682
    %684 = vmatprep.mubr.f32.mxu0 0.0
    %685 = vmatmul.mubr.f32.gmra.mxu0 %v528
    %v686 = vpop.f32.mrf.mxu0
    %v687 = vadd.f32 0.0, %v686
    %v688 = vpop.f32.mrf.mxu0
    %v689 = vadd.f32 0.0, %v688
    %690 = vdwg.mxu0
    %v691 = vmul.f32 %v356, %v597
    %v692 = vmul.f32 %v358, %v599
    %v693 = vmul.f32 %v362, %v603
    %v694 = vmul.f32 %v364, %v605
    %v695 = vmul.f32 %v368, %v609
    %v696 = vmul.f32 %v370, %v611
    %v697 = vmul.f32 %v374, %v615
    %v698 = vmul.f32 %v376, %v617
    %v699 = vmul.f32 %v380, %v621
    %v700 = vmul.f32 %v382, %v623
    %v701 = vmul.f32 %v386, %v627
    %v702 = vmul.f32 %v388, %v629
    %v703 = vmul.f32 %v392, %v633
    %v704 = vmul.f32 %v394, %v635
    %v705 = vmul.f32 %v398, %v639
    %v706 = vmul.f32 %v400, %v641
    %v707 = vmul.f32 %v404, %v645
    %v708 = vmul.f32 %v406, %v647
    %v709 = vmul.f32 %v410, %v651
    %v710 = vmul.f32 %v412, %v653
    %v711 = vmul.f32 %v416, %v657
    %v712 = vmul.f32 %v418, %v659
    %v713 = vmul.f32 %v422, %v663
    %v714 = vmul.f32 %v424, %v665
    %v715 = vmul.f32 %v428, %v669
    %v716 = vmul.f32 %v430, %v671
    %v717 = vmul.f32 %v434, %v675
    %v718 = vmul.f32 %v436, %v677
    %v719 = vmul.f32 %v440, %v681
    %v720 = vmul.f32 %v442, %v683
    %v721 = vmul.f32 %v446, %v687
    %v722 = vmul.f32 %v448, %v689
    %v723 = vadd.f32 %v691, %v693
    %v724 = vadd.f32 %v723, %v695
    %v725 = vadd.f32 %v724, %v697
    %v726 = vadd.f32 %v725, %v699
    %v727 = vadd.f32 %v726, %v701
    %v728 = vadd.f32 %v727, %v703
    %v729 = vadd.f32 %v728, %v705
    %v730 = vadd.f32 %v729, %v707
    %v731 = vadd.f32 %v730, %v709
    %v732 = vadd.f32 %v731, %v711
    %v733 = vadd.f32 %v732, %v713
    %v734 = vadd.f32 %v733, %v715
    %v735 = vadd.f32 %v734, %v717
    %v736 = vadd.f32 %v735, %v719
    %v737 = vadd.f32 %v736, %v721
    %v738 = vrot.slane %v737, 4
    %v739 = vadd.f32 %v737, %v738
    %v740 = vrot.slane %v739, 2
    %v741 = vadd.f32 %v739, %v740
    %v742 = vrot.slane %v741, 1
    %v743 = vadd.f32 %v741, %v742
    %v744 = vadd.f32 %v692, %v694
    %v745 = vadd.f32 %v744, %v696
    %v746 = vadd.f32 %v745, %v698
    %v747 = vadd.f32 %v746, %v700
    %v748 = vadd.f32 %v747, %v702
    %v749 = vadd.f32 %v748, %v704
    %v750 = vadd.f32 %v749, %v706
    %v751 = vadd.f32 %v750, %v708
    %v752 = vadd.f32 %v751, %v710
    %v753 = vadd.f32 %v752, %v712
    %v754 = vadd.f32 %v753, %v714
    %v755 = vadd.f32 %v754, %v716
    %v756 = vadd.f32 %v755, %v718
    %v757 = vadd.f32 %v756, %v720
    %v758 = vadd.f32 %v757, %v722
    %v759 = vrot.slane %v758, 4
    %v760 = vadd.f32 %v758, %v759
    %v761 = vrot.slane %v760, 2
    %v762 = vadd.f32 %v760, %v761
    %v763 = vrot.slane %v762, 1
    %v764 = vadd.f32 %v762, %v763
    %v765 = vxor.u32 %v743, 2147483648
    %v766 = vxor.u32 %v764, 2147483648
    %v767 = vmul.f32 %v765, 1.442695
    %v768 = vpow.pop %v767
    %v769 = vmul.f32 %v766, 1.442695
    %v770 = vpow.pop %v769
    %v771 = vadd.f32 %v768, 1.0
    %v772 = vadd.f32 %v770, 1.0
    %v773 = vrcp.pop %v771
    %v774 = vmul.f32 1.0, %v773
    %v775 = vrcp.pop %v772
    %v776 = vmul.f32 1.0, %v775
    %v779 = vcombine.low %v774, %v776
    %v781 = vunpack.c.l.s4 1966171168
    %v782 = vunpack.c.0.s8 %v781
    %v783 = vlaneseq
    %v784 = vshrl.u32 %v783, 7
    %v785 = vsub.s32 %v782, %v784
    %v786 = vrot.slane %v779, %v785
    %v788 = vunpack.c.l.s4 1966171168
    %v789 = vunpack.c.0.s8 %v788
    %v790 = vlaneseq
    %v791 = vshrl.u32 %v790, 7
    %v792 = vsub.s32 %v789, %v791
    %v793 = vrot.slane %v786, %v792
    %v795 = vlaneseq
    %vm796 = vcmp.ge.s32.totalorder %v795, 0
    %vm797 = vcmp.lt.s32.totalorder %v795, 256
    %vm798 = vmand %vm796, %vm797
    %799 = vst.msk [vmem:[#allocation10] sm:$0x3] %vm798, %v793
    // Predicated region
    $region34: #{tpu_custom_call.1} parent=1 // pred_check
      _
    $region35: #{tpu_custom_call.1} parent=1 // pred_check_branch
      %801 = sbr.rel (0) target = $region37
    $region36: #{tpu_custom_call.1} parent=1 // pred_region
      %s803 = ssub.s32 32, 32
      %804 = vsyncadd [#allocation4], %s803
      %s806 = sshll.u32 [#allocation10], 4
      %s807 = int_to_ptr.vmem [resolvable:$true] %s806
      %809 = dma.vmem_to_hbm [thread:$0]  %s807, 32, %s4, [#allocation4]
    $region37: #{tpu_custom_call.1} parent=1 // pred_fallthru
      _
    // Predicated region
    $region38: #{tpu_custom_call.1} parent=1 // pred_check
      _
    $region39: #{tpu_custom_call.1} parent=1 // pred_check_branch
      %811 = sbr.rel (0) target = $region41
    $region40: #{tpu_custom_call.1} parent=1 // pred_region
      %812 = dma.done [#allocation4], 32
    $region41: #{tpu_custom_call.1} parent=1 // pred_fallthru
      _
    %813 = vsyncpa [#allocation3], 1
    %814 = vsyncpa [#allocation6], 1
    %815 = vsyncpa [#allocation9], 1
    %816 = vsyncpa [#allocation4], 1

</llo_original>
